<compile_context>
chip_gen: v6e
topology: v6e:2x2x1
jax: 0.10.0
libtpu: 0.0.40
codegen_flags: <defaults>
</compile_context>

<pallas_src>
import functools

import jax
import jax.numpy as jnp
from jax.experimental import pallas as pl
from jax.experimental.pallas import tpu as pltpu

_NEG_BIG = -1e30  # masks padded output lanes inside the softmax


def _round_up(n, m):
    return (n + m - 1) // m * m


def generator_kernel(x_ref, w_ref, b_ref, o_ref, *, dims):
    """One batch tile: 3 matmuls + ReLUs + log-softmax, all in VMEM."""
    in_p, h0p, h1p, outp = dims
    cdt = w_ref.dtype  # compute dtype for MXU operands (bf16)

    # x arrives as f32; cast on the VPU (free slot filler, no wrapper pass).
    x = x_ref[...].astype(cdt)  # (TB, in_p)

    # Static, sublane/lane-aligned slices of the packed weight / bias slabs.
    w1 = w_ref[0:in_p, 0:h0p]
    w2 = w_ref[in_p:in_p + h0p, 0:h1p]
    w3 = w_ref[in_p + h0p:in_p + h0p + h1p, 0:outp]
    b1 = b_ref[0:1, 0:h0p]   # f32
    b2 = b_ref[1:2, 0:h1p]
    b3 = b_ref[2:3, 0:outp]  # padded lanes carry -1e30 (bakes in the mask)

    # Layer 1: Linear + ReLU (bf16 MXU operands, f32 accumulation / VPU math)
    h1 = jnp.dot(x, w1, preferred_element_type=jnp.float32) + b1
    h1 = jnp.maximum(h1, 0.0).astype(cdt)

    # Layer 2: Linear + ReLU
    h2 = jnp.dot(h1, w2, preferred_element_type=jnp.float32) + b2
    h2 = jnp.maximum(h2, 0.0).astype(cdt)

    # Layer 3: Linear. Padded lanes: 0 * w3 + (-1e30) -> vanish in softmax.
    logits = jnp.dot(h2, w3, preferred_element_type=jnp.float32) + b3

    # LogSoftmax over dim=1 (lane axis), numerically stable.
    m = jnp.max(logits, axis=-1, keepdims=True)
    lse = jnp.log(jnp.sum(jnp.exp(logits - m), axis=-1, keepdims=True)) + m
    o_ref[...] = (logits - lse).astype(o_ref.dtype)


def pack_params(params, in_nodes, hid_nodes, out_nodes,
                compute_dtype=jnp.bfloat16):
    """Pad each layer to lane/sublane-aligned sizes and pack into two slabs.

    Returns (w_all, b_all, dims):
      w_all: (in_p + h0p + h1p, wcol) compute_dtype, zero-padded weights
             stacked row-wise (each stored as (in, out) == PyTorch W.T).
      b_all: (3, wcol) f32; b1/b2 zero-padded, b3 padded with -1e30 so the
             padded output lanes are masked out of the softmax for free.
      dims : static (in_p, h0p, h1p, outp) for the kernel.
    """
    h0, h1 = hid_nodes
    in_p = _round_up(in_nodes, 16)      # 16: bf16 sublane packing alignment
    h0p = _round_up(h0, 128)
    h1p = _round_up(h1, 128)
    outp = _round_up(out_nodes, 128)
    wcol = max(h0p, h1p, outp)

    def pad_to(a, rows, cols, fill=0.0):
        return jnp.pad(a, ((0, rows - a.shape[0]), (0, cols - a.shape[1])),
                       constant_values=fill)

    w_all = jnp.concatenate(
        [pad_to(params["w1"], in_p, wcol),
         pad_to(params["w2"], h0p, wcol),
         pad_to(params["w3"], h1p, wcol)], axis=0).astype(compute_dtype)

    b_all = jnp.concatenate(
        [pad_to(params["b1"], 1, wcol),
         pad_to(params["b2"], 1, wcol),
         pad_to(params["b3"], 1, wcol, fill=_NEG_BIG)],
        axis=0).astype(jnp.float32)

    dims = (in_p, h0p, h1p, outp)
    return w_all, b_all, dims


def _choose_tb(B, block_batch):
    """Batch tile: 16-aligned (bf16 sublanes), >=2 grid steps when B allows
    (so v7x's second TensorCore gets work), capped at block_batch."""
    assert block_batch % 16 == 0 and block_batch >= 16
    half = _round_up((B + 1) // 2, 16)
    return max(16, min(block_batch, half))


def generator_forward(x, packed, *, block_batch=1024):
    """x: (B, in_nodes) f32; packed: output of pack_params.

    Returns (B, out_nodes) bf16 log-probabilities (lane-dense bf16 store
    halves output HBM writeback; cast to f32 downstream if needed).
    """
    w_all, b_all, dims = packed
    in_p, h0p, h1p, outp = dims
    B, in_nodes = x.shape

    TB = _choose_tb(B, block_batch)
    B_pad = _round_up(B, TB)

    # Keep x in f32 (no wrapper-side cast pass); pad only if actually needed.
    x_p = x
    if B_pad != B or in_p != in_nodes:
        x_p = jnp.pad(x, ((0, B_pad - B), (0, in_p - in_nodes)))

    kernel = functools.partial(generator_kernel, dims=dims)
    out = pl.pallas_call(
        kernel,
        out_shape=jax.ShapeDtypeStruct((B_pad, outp), jnp.bfloat16),
        grid=(B_pad // TB,),
        in_specs=[
            pl.BlockSpec((TB, in_p), lambda i: (i, 0)),      # batch-tiled x (f32)
            pl.BlockSpec(w_all.shape, lambda i: (0, 0)),      # resident weights
            pl.BlockSpec(b_all.shape, lambda i: (0, 0)),      # resident biases
        ],
        out_specs=pl.BlockSpec((TB, outp), lambda i: (i, 0)),
        compiler_params=pltpu.CompilerParams(
            dimension_semantics=("parallel",)),               # v7x: 2 TCs
    )(x_p, w_all, b_all)

    return out[:B, :out_nodes]


def init_params(key, in_nodes, hid_nodes, out_nodes):
    """Deterministic init mimicking nn.Linear's uniform(-1/sqrt(fan_in), 1/sqrt(fan_in))."""
    dims = [in_nodes, hid_nodes[0], hid_nodes[1], out_nodes]
    params = {}
    for i in range(3):
        fan_in, fan_out = dims[i], dims[i + 1]
        key, kw, kb = jax.random.split(key, 3)
        bound = 1.0 / jnp.sqrt(jnp.float32(fan_in))
        # stored as (in, out) == PyTorch weight.T
        params[f"w{i+1}"] = jax.random.uniform(
            kw, (fan_in, fan_out), jnp.float32, -bound, bound)
        params[f"b{i+1}"] = jax.random.uniform(
            kb, (1, fan_out), jnp.float32, -bound, bound)
    return params


def generator_ref(x, params, compute_dtype=jnp.float32):
    """Pure-JAX reference; compute_dtype lets us match the kernel's bf16 matmuls."""
    h = x
    for i in (1, 2):
        w = params[f"w{i}"].astype(compute_dtype)
        h = jnp.maximum(
            jnp.dot(h.astype(compute_dtype), w,
                    preferred_element_type=jnp.float32) + params[f"b{i}"], 0.0)
    logits = jnp.dot(h.astype(compute_dtype), params["w3"].astype(compute_dtype),
                     preferred_element_type=jnp.float32) + params["b3"]
    return jax.nn.log_softmax(logits, axis=1)


if __name__ == "__main__":
    in_nodes, hid_nodes, out_nodes = 32, (64, 48), 10
    batch = 8

    key = jax.random.PRNGKey(0)
    key, kx = jax.random.split(key)
    x = jax.random.normal(kx, (batch, in_nodes), jnp.float32)
    params = init_params(key, in_nodes, hid_nodes, out_nodes)
    packed = pack_params(params, in_nodes, hid_nodes, out_nodes)

    out = jax.block_until_ready(generator_forward(x, packed))
    assert out.shape == (batch, out_nodes)
    out_f32 = out.astype(jnp.float32)

    ref_bf16 = generator_ref(x, params, compute_dtype=jnp.bfloat16)
    ref_f32 = generator_ref(x, params, compute_dtype=jnp.float32)
    # bf16 output + bf16 matmuls -> compare with bf16-appropriate tolerances.
    assert jnp.allclose(out_f32, ref_bf16, atol=3e-2, rtol=3e-2), "mismatch vs bf16 reference"
    assert jnp.allclose(out_f32, ref_f32, atol=1e-1, rtol=1e-1), "mismatch vs f32 reference"
    # log-softmax rows should sum (in prob space) to ~1
    assert jnp.allclose(jnp.sum(jnp.exp(out_f32), axis=1), 1.0, atol=3e-2)

    # Exercise the batched/tiled path: B=200 -> TB=112, B_pad=224, grid=(2,)
    # with resident weights across grid steps (both TCs busy on v7x).
    xb = jax.random.normal(jax.random.PRNGKey(1), (200, in_nodes), jnp.float32)
    outb = jax.block_until_ready(generator_forward(xb, packed, block_batch=128))
    refb = generator_ref(xb, params, compute_dtype=jnp.bfloat16)
    assert outb.shape == (200, out_nodes)
    assert jnp.allclose(outb.astype(jnp.float32), refb, atol=3e-2, rtol=3e-2), \
        "mismatch (batched path)"

    print("KERNEL_OK")
</pallas_src>

<mosaic_0001>
module attributes {stable_mosaic.version = 11 : i64} {
  func.func @generator_kernel(%arg0: i32, %arg1: memref<16x32xf32, #tpu.memory_space<vmem>>, %arg2: memref<288x128xbf16, #tpu.memory_space<vmem>>, %arg3: memref<3x128xf32, #tpu.memory_space<vmem>>, %arg4: memref<16x128xbf16, #tpu.memory_space<vmem>>) attributes {dimension_semantics = [#tpu.dimension_semantics<parallel>], iteration_bounds = array<i64: 1>, scalar_prefetch = 0 : i64, scratch_operands = 0 : i64, tpu.core_type = #tpu.core_type<tc>, window_params = [{transform_indices = @transform_0, window_bounds = array<i64: 16, 32>}, {pipeline_mode = #tpu.pipeline_mode<synchronous>, transform_indices = @transform_1, window_bounds = array<i64: 288, 128>}, {pipeline_mode = #tpu.pipeline_mode<synchronous>, transform_indices = @transform_2, window_bounds = array<i64: 3, 128>}, {transform_indices = @transform_3, window_bounds = array<i64: 16, 128>}]} {
    %c0 = arith.constant 0 : index
    %c0_0 = arith.constant 0 : index
    %0 = vector.load %arg1[%c0, %c0_0] : memref<16x32xf32, #tpu.memory_space<vmem>>, vector<16x32xf32>
    %1 = arith.truncf %0 : vector<16x32xf32> to vector<16x32xbf16>
    %c0_1 = arith.constant 0 : index
    %c0_2 = arith.constant 0 : index
    %2 = vector.load %arg2[%c0_1, %c0_2] : memref<288x128xbf16, #tpu.memory_space<vmem>>, vector<32x128xbf16>
    %c32 = arith.constant 32 : index
    %c0_3 = arith.constant 0 : index
    %3 = vector.load %arg2[%c32, %c0_3] : memref<288x128xbf16, #tpu.memory_space<vmem>>, vector<128x128xbf16>
    %c160 = arith.constant 160 : index
    %c0_4 = arith.constant 0 : index
    %4 = vector.load %arg2[%c160, %c0_4] : memref<288x128xbf16, #tpu.memory_space<vmem>>, vector<128x128xbf16>
    %c0_5 = arith.constant 0 : index
    %c0_6 = arith.constant 0 : index
    %5 = vector.load %arg3[%c0_5, %c0_6] : memref<3x128xf32, #tpu.memory_space<vmem>>, vector<1x128xf32>
    %c1 = arith.constant 1 : index
    %c0_7 = arith.constant 0 : index
    %6 = vector.load %arg3[%c1, %c0_7] : memref<3x128xf32, #tpu.memory_space<vmem>>, vector<1x128xf32>
    %c2 = arith.constant 2 : index
    %c0_8 = arith.constant 0 : index
    %7 = vector.load %arg3[%c2, %c0_8] : memref<3x128xf32, #tpu.memory_space<vmem>>, vector<1x128xf32>
    %cst = arith.constant dense<0.000000e+00> : vector<16x128xf32>
    %8 = tpu.matmul %1, %2, %cst {dimension_numbers = #tpu.dot_dimension_numbers<[1], [0], [0], [1], [0, 0, 1, 1], [], []>} : vector<16x32xbf16>, vector<32x128xbf16>, vector<16x128xf32> -> vector<16x128xf32>
    %9 = vector.broadcast %5 : vector<1x128xf32> to vector<16x128xf32>
    %10 = arith.addf %8, %9 : vector<16x128xf32>
    %cst_9 = arith.constant 0.000000e+00 : f32
    %11 = vector.broadcast %cst_9 : f32 to vector<16x128xf32>
    %12 = arith.maximumf %10, %11 : vector<16x128xf32>
    %13 = arith.truncf %12 : vector<16x128xf32> to vector<16x128xbf16>
    %cst_10 = arith.constant dense<0.000000e+00> : vector<16x128xf32>
    %14 = tpu.matmul %13, %3, %cst_10 {dimension_numbers = #tpu.dot_dimension_numbers<[1], [0], [0], [1], [0, 0, 1, 1], [], []>} : vector<16x128xbf16>, vector<128x128xbf16>, vector<16x128xf32> -> vector<16x128xf32>
    %15 = vector.broadcast %6 : vector<1x128xf32> to vector<16x128xf32>
    %16 = arith.addf %14, %15 : vector<16x128xf32>
    %cst_11 = arith.constant 0.000000e+00 : f32
    %17 = vector.broadcast %cst_11 : f32 to vector<16x128xf32>
    %18 = arith.maximumf %16, %17 : vector<16x128xf32>
    %19 = arith.truncf %18 : vector<16x128xf32> to vector<16x128xbf16>
    %cst_12 = arith.constant dense<0.000000e+00> : vector<16x128xf32>
    %20 = tpu.matmul %19, %4, %cst_12 {dimension_numbers = #tpu.dot_dimension_numbers<[1], [0], [0], [1], [0, 0, 1, 1], [], []>} : vector<16x128xbf16>, vector<128x128xbf16>, vector<16x128xf32> -> vector<16x128xf32>
    %21 = vector.broadcast %7 : vector<1x128xf32> to vector<16x128xf32>
    %22 = arith.addf %20, %21 : vector<16x128xf32>
    %cst_13 = arith.constant dense<0xFF800000> : vector<16xf32>
    %23 = vector.multi_reduction <maximumf>, %22, %cst_13 [1] : vector<16x128xf32> to vector<16xf32>
    %24 = vector.shape_cast %23 : vector<16xf32> to vector<16x1xf32>
    %25 = vector.broadcast %24 : vector<16x1xf32> to vector<16x128xf32>
    %26 = arith.subf %22, %25 : vector<16x128xf32>
    %27 = math.exp %26 : vector<16x128xf32>
    %cst_14 = arith.constant dense<0.000000e+00> : vector<16xf32>
    %28 = vector.multi_reduction <add>, %27, %cst_14 [1] : vector<16x128xf32> to vector<16xf32>
    %29 = vector.shape_cast %28 : vector<16xf32> to vector<16x1xf32>
    %30 = math.log %29 : vector<16x1xf32>
    %31 = arith.addf %30, %24 : vector<16x1xf32>
    %32 = vector.broadcast %31 : vector<16x1xf32> to vector<16x128xf32>
    %33 = arith.subf %22, %32 : vector<16x128xf32>
    %34 = arith.truncf %33 : vector<16x128xf32> to vector<16x128xbf16>
    %c0_15 = arith.constant 0 : index
    %c0_16 = arith.constant 0 : index
    %35 = vector.load %arg4[%c0_15, %c0_16] : memref<16x128xbf16, #tpu.memory_space<vmem>>, vector<16x128xbf16>
    tpu.vector_store %arg4[%c0_15, %c0_16], %34 {strides = array<i32>} : memref<16x128xbf16, #tpu.memory_space<vmem>>, vector<16x128xbf16>,
    return
  }
  func.func @transform_0(%arg0: i32) -> (i32, i32) {
    %c0_i32 = arith.constant 0 : i32
    %c0_i32_0 = arith.constant 0 : i32
    return %arg0, %c0_i32 : i32, i32
  }
  func.func @transform_1(%arg0: i32) -> (i32, i32) {
    %c0_i32 = arith.constant 0 : i32
    %c0_i32_0 = arith.constant 0 : i32
    %c0_i32_1 = arith.constant 0 : i32
    return %c0_i32, %c0_i32_0 : i32, i32
  }
  func.func @transform_2(%arg0: i32) -> (i32, i32) {
    %c0_i32 = arith.constant 0 : i32
    %c0_i32_0 = arith.constant 0 : i32
    %c0_i32_1 = arith.constant 0 : i32
    return %c0_i32, %c0_i32_0 : i32, i32
  }
  func.func @transform_3(%arg0: i32) -> (i32, i32) {
    %c0_i32 = arith.constant 0 : i32
    %c0_i32_0 = arith.constant 0 : i32
    return %arg0, %c0_i32 : i32, i32
  }
}

</mosaic_0001>

<llo_original>
// kernel: tpu_custom_call.1
$region0: #{tpu_custom_call.1}
  #allocation0 [shape = 'u32[]', space=smem, size = 0x4, offset = 0x4, fixed_abs, tag = 'smem constant byte address 0x4 - core index']
  #allocation1 [shape = 'u32[144,128]{1,0:T(1,128)}', space=vmem, size = 0x12000, scoped, tag = 'internal scratch']
  %s0 = inlined_call_operand.hbm [shape: f32[16,32], index: 0, kind: input, shape index: {}]
  %s1 = inlined_call_operand.hbm [shape: bf16[288,128], index: 1, kind: input, shape index: {}]
  %s2 = inlined_call_operand.hbm [shape: f32[3,128], index: 2, kind: input, shape index: {}]
  %s3 = inlined_call_operand.hbm [shape: bf16[16,128], index: 3, kind: output, shape index: {}]
  %s4 = sld [smem:[#allocation0]]
  $region34: #{tpu_custom_call.1} parent=0
    _
  %s6 = ssub.s32 1, %s4
  %s7 = scalar_select 0, %s6, %s4
  $region1: #{tpu_custom_call.1} parent=0
    #allocation2 [shape = 'u8[8192]{0}', space=vmem, size = 0x2000, scoped, tag = 'input window, operand 0, single buffered']
    #allocation3 [shape = 's32[1]{0}', space=sflag, size = 0x4, scoped, tag = 'scoped memory for tpu_custom_call.1']
    #allocation4 [shape = 's32[1]{0}', space=sflag, size = 0x4, scoped, tag = 'scoped memory for tpu_custom_call.1']
    #allocation5 [shape = 'u8[73728]{0}', space=vmem, size = 0x12000, scoped, tag = 'input window, operand 1, single buffered']
    #allocation6 [shape = 's32[1]{0}', space=sflag, size = 0x4, scoped, tag = 'scoped memory for tpu_custom_call.1']
    #allocation7 [shape = 'u8[2048]{0}', space=vmem, size = 0x800, scoped, tag = 'input window, operand 2, single buffered']
    #allocation8 [shape = 'u8[4096]{0}', space=vmem, size = 0x1000, scoped, tag = 'output window, operand 0, single buffered']
    %8 = vsyncpa [#allocation3], 0
    %9 = vsyncpa [#allocation6], 0
    %10 = vsyncpa [#allocation4], 0
    // Predicated region
    $region2: #{tpu_custom_call.1} parent=1 // pred_check
      _
    $region3: #{tpu_custom_call.1} parent=1 // pred_check_branch
      %12 = sbr.rel (0) target = $region5
    $region4: #{tpu_custom_call.1} parent=1 // pred_region
      %s14 = ssub.s32 256, 256
      %15 = vsyncadd [#allocation3], %s14
      %s16 = sshll.u32 [#allocation2], 4
      %s17 = int_to_ptr.vmem [resolvable:$true] %s16
      %22 = dma.hbm_to_vmem [thread:$0]  %s0, 256, %s17, [#allocation3], 128, 128, 8
    $region5: #{tpu_custom_call.1} parent=1 // pred_fallthru
      _
    // Predicated region
    $region6: #{tpu_custom_call.1} parent=1 // pred_check
      _
    $region7: #{tpu_custom_call.1} parent=1 // pred_check_branch
      %24 = sbr.rel (0) target = $region9
    $region8: #{tpu_custom_call.1} parent=1 // pred_region
      %s26 = ssub.s32 2304, 2304
      %27 = vsyncadd [#allocation6], %s26
      %s28 = sshll.u32 [#allocation5], 4
      %s29 = int_to_ptr.vmem [resolvable:$true] %s28
      %34 = dma.hbm_to_vmem [thread:$0]  %s1, 2304, %s29, [#allocation6], 64, 64, 4
    $region9: #{tpu_custom_call.1} parent=1 // pred_fallthru
      _
    // Predicated region
    $region10: #{tpu_custom_call.1} parent=1 // pred_check
      _
    $region11: #{tpu_custom_call.1} parent=1 // pred_check_branch
      %36 = sbr.rel (0) target = $region13
    $region12: #{tpu_custom_call.1} parent=1 // pred_region
      %s38 = ssub.s32 64, 64
      %39 = vsyncadd [#allocation6], %s38
      %s41 = sshll.u32 [#allocation7], 4
      %s42 = int_to_ptr.vmem [resolvable:$true] %s41
      %44 = dma.hbm_to_vmem [thread:$0]  %s2, 64, %s42, [#allocation6]
    $region13: #{tpu_custom_call.1} parent=1 // pred_fallthru
      _
    // Predicated region
    $region14: #{tpu_custom_call.1} parent=1 // pred_check
      _
    $region15: #{tpu_custom_call.1} parent=1 // pred_check_branch
      %46 = sbr.rel (0) target = $region17
    $region16: #{tpu_custom_call.1} parent=1 // pred_region
      %47 = dma.done [#allocation3], 256
    $region17: #{tpu_custom_call.1} parent=1 // pred_fallthru
      _
    // Predicated region
    $region18: #{tpu_custom_call.1} parent=1 // pred_check
      _
    $region19: #{tpu_custom_call.1} parent=1 // pred_check_branch
      %49 = sbr.rel (0) target = $region21
    $region20: #{tpu_custom_call.1} parent=1 // pred_region
      %50 = dma.done [#allocation6], 2304
    $region21: #{tpu_custom_call.1} parent=1 // pred_fallthru
      _
    // Predicated region
    $region22: #{tpu_custom_call.1} parent=1 // pred_check
      _
    $region23: #{tpu_custom_call.1} parent=1 // pred_check_branch
      %52 = sbr.rel (0) target = $region25
    $region24: #{tpu_custom_call.1} parent=1 // pred_region
      %53 = dma.done [#allocation6], 64
    $region25: #{tpu_custom_call.1} parent=1 // pred_fallthru
      _
    %v55 = vld [vmem:[#allocation2] sm:$0xff]
    %v56 = vld [vmem:[#allocation2 + $0x8] sm:$0xff]
    %v57 = vpack.c.bf16 %v56, %v55
    %v58 = vld [vmem:[#allocation5] sm:$0xf]
    %v59 = vld [vmem:[#allocation5 + $0x4] sm:$0xf]
    %v60 = vld [vmem:[#allocation5 + $0x8] sm:$0xf]
    %v61 = vld [vmem:[#allocation5 + $0xc] sm:$0xf]
    %v62 = vld [vmem:[#allocation5 + $0x10] sm:$0xf]
    %v63 = vld [vmem:[#allocation5 + $0x14] sm:$0xf]
    %v64 = vld [vmem:[#allocation5 + $0x18] sm:$0xf]
    %v65 = vld [vmem:[#allocation5 + $0x1c] sm:$0xf]
    %v66 = vld [vmem:[#allocation5 + $0x20] sm:$0xf]
    %v67 = vld [vmem:[#allocation5 + $0x24] sm:$0xf]
    %v68 = vld [vmem:[#allocation5 + $0x28] sm:$0xf]
    %v69 = vld [vmem:[#allocation5 + $0x2c] sm:$0xf]
    %v70 = vld [vmem:[#allocation5 + $0x30] sm:$0xf]
    %v71 = vld [vmem:[#allocation5 + $0x34] sm:$0xf]
    %v72 = vld [vmem:[#allocation5 + $0x38] sm:$0xf]
    %v73 = vld [vmem:[#allocation5 + $0x3c] sm:$0xf]
    %v74 = vld [vmem:[#allocation5 + $0x40] sm:$0xf]
    %v75 = vld [vmem:[#allocation5 + $0x44] sm:$0xf]
    %v76 = vld [vmem:[#allocation5 + $0x48] sm:$0xf]
    %v77 = vld [vmem:[#allocation5 + $0x4c] sm:$0xf]
    %v78 = vld [vmem:[#allocation5 + $0x50] sm:$0xf]
    %v79 = vld [vmem:[#allocation5 + $0x54] sm:$0xf]
    %v80 = vld [vmem:[#allocation5 + $0x58] sm:$0xf]
    %v81 = vld [vmem:[#allocation5 + $0x5c] sm:$0xf]
    %v82 = vld [vmem:[#allocation5 + $0x60] sm:$0xf]
    %v83 = vld [vmem:[#allocation5 + $0x64] sm:$0xf]
    %v84 = vld [vmem:[#allocation5 + $0x68] sm:$0xf]
    %v85 = vld [vmem:[#allocation5 + $0x6c] sm:$0xf]
    %v86 = vld [vmem:[#allocation5 + $0x70] sm:$0xf]
    %v87 = vld [vmem:[#allocation5 + $0x74] sm:$0xf]
    %v88 = vld [vmem:[#allocation5 + $0x78] sm:$0xf]
    %v89 = vld [vmem:[#allocation5 + $0x7c] sm:$0xf]
    %v90 = vld [vmem:[#allocation5 + $0x80] sm:$0xf]
    %v91 = vld [vmem:[#allocation5 + $0x84] sm:$0xf]
    %v92 = vld [vmem:[#allocation5 + $0x88] sm:$0xf]
    %v93 = vld [vmem:[#allocation5 + $0x8c] sm:$0xf]
    %v94 = vld [vmem:[#allocation7] sm:$0x1]
    %v95 = vld [vmem:[#allocation7 + $0x1] sm:$0x1]
    %v96 = vld [vmem:[#allocation7 + $0x2] sm:$0x1]
    %v97 = vlaneseq
    %v98 = vshrl.u32 %v97, 7
    %v99 = vsub.s32 0, %v98
    %v100 = vrot.slane %v94, %v99
    %v105 = vunpack.c.l.b16 %v58
    %v106 = vunpack.c.l.b16 %v59
    %v107 = vunpack.c.l.b16 %v60
    %v108 = vunpack.c.l.b16 %v61
    %v109 = vpack.c.b16 %v106, %v105
    %v110 = vpack.c.b16 %v108, %v107
    %vm113 = vcmask 261120
    %v115 = vsel %vm113, %v57, 0
    %117 = vmatprep.subr.bf16.mxu0 0
    %118 = vmatpush1.bf16.msra.mxu0 0
    %119 = vmatprep.subr.bf16.mxu0 0
    %120 = vmatpush1.bf16.msra.mxu0 0
    %121 = vmatprep.subr.bf16.mxu0 0
    %122 = vmatpush1.bf16.msra.mxu0 0
    %123 = vmatprep.subr.bf16.mxu0 0
    %124 = vmatpush1.bf16.msra.mxu0 0
    %125 = vmatprep.subr.bf16.mxu0 0
    %126 = vmatpush1.bf16.msra.mxu0 0
    %127 = vmatprep.subr.bf16.mxu0 0
    %128 = vmatpush1.bf16.msra.mxu0 0
    %129 = vmatprep.subr.bf16.mxu0 0
    %130 = vmatpush1.bf16.msra.mxu0 %v110
    %131 = vmatprep.subr.bf16.mxu0 0
    %132 = vmatpush1.bf16.msra.mxu0 %v109
    %133 = vmatprep.subr.bf16.mxu0 0
    %134 = vmatpush2.bf16.msra.mxu0 0
    %135 = vmatprep.subr.bf16.mxu0 0
    %136 = vmatpush2.bf16.msra.mxu0 0
    %137 = vmatprep.subr.bf16.mxu0 0
    %138 = vmatpush2.bf16.msra.mxu0 0
    %139 = vmatprep.subr.bf16.mxu0 0
    %140 = vmatpush2.bf16.msra.mxu0 0
    %141 = vmatprep.subr.bf16.mxu0 0
    %142 = vmatpush2.bf16.msra.mxu0 0
    %143 = vmatprep.subr.bf16.mxu0 0
    %144 = vmatpush2.bf16.msra.mxu0 0
    %145 = vmatprep.subr.bf16.mxu0 0
    %146 = vmatpush2.bf16.msra.mxu0 0
    %147 = vmatprep.subr.bf16.mxu0 0
    %148 = vmatpush2.bf16.msra.mxu0 0
    %149 = vmatprep.mubr.bf16.mxu0 0
    %150 = vmatmul.mubr.bf16.gmra.mxu0 %v115
    %v151 = vpop.f32.mrf.mxu0
    %v152 = vadd.f32 %v100, %v151
    %v153 = vpop.f32.mrf.mxu0
    %v154 = vpop.f32.mrf.mxu0
    %v155 = vadd.f32 %v100, %v154
    %v156 = vpop.f32.mrf.mxu0
    %157 = vdwg.mxu0
    %v158 = vmax.f32 %v152, 0.0
    %v159 = vmax.f32 %v155, 0.0
    %v160 = vpack.c.bf16 %v159, %v158
    %v161 = vlaneseq
    %v162 = vshrl.u32 %v161, 7
    %v163 = vsub.s32 0, %v162
    %v164 = vrot.slane %v95, %v163
    %v181 = vunpack.c.l.b16 %v62
    %v182 = vunpack.c.l.b16 %v63
    %v183 = vunpack.c.l.b16 %v64
    %v184 = vunpack.c.l.b16 %v65
    %v185 = vunpack.c.l.b16 %v66
    %v186 = vunpack.c.l.b16 %v67
    %v187 = vunpack.c.l.b16 %v68
    %v188 = vunpack.c.l.b16 %v69
    %v189 = vunpack.c.l.b16 %v70
    %v190 = vunpack.c.l.b16 %v71
    %v191 = vunpack.c.l.b16 %v72
    %v192 = vunpack.c.l.b16 %v73
    %v193 = vunpack.c.l.b16 %v74
    %v194 = vunpack.c.l.b16 %v75
    %v195 = vunpack.c.l.b16 %v76
    %v196 = vunpack.c.l.b16 %v77
    %v197 = vpack.c.b16 %v182, %v181
    %v198 = vpack.c.b16 %v184, %v183
    %v199 = vpack.c.b16 %v186, %v185
    %v200 = vpack.c.b16 %v188, %v187
    %v201 = vpack.c.b16 %v190, %v189
    %v202 = vpack.c.b16 %v192, %v191
    %v203 = vpack.c.b16 %v194, %v193
    %v204 = vpack.c.b16 %v196, %v195
    %213 = vmatprep.subr.bf16.mxu0 0
    %214 = vmatpush1.bf16.msra.mxu0 %v204
    %215 = vmatprep.subr.bf16.mxu0 0
    %216 = vmatpush1.bf16.msra.mxu0 %v203
    %217 = vmatprep.subr.bf16.mxu0 0
    %218 = vmatpush1.bf16.msra.mxu0 %v202
    %219 = vmatprep.subr.bf16.mxu0 0
    %220 = vmatpush1.bf16.msra.mxu0 %v201
    %221 = vmatprep.subr.bf16.mxu0 0
    %222 = vmatpush1.bf16.msra.mxu0 %v200
    %223 = vmatprep.subr.bf16.mxu0 0
    %224 = vmatpush1.bf16.msra.mxu0 %v199
    %225 = vmatprep.subr.bf16.mxu0 0
    %226 = vmatpush1.bf16.msra.mxu0 %v198
    %227 = vmatprep.subr.bf16.mxu0 0
    %228 = vmatpush1.bf16.msra.mxu0 %v197
    %229 = vmatprep.subr.bf16.mxu0 0
    %230 = vmatpush2.bf16.msra.mxu0 0
    %231 = vmatprep.subr.bf16.mxu0 0
    %232 = vmatpush2.bf16.msra.mxu0 0
    %233 = vmatprep.subr.bf16.mxu0 0
    %234 = vmatpush2.bf16.msra.mxu0 0
    %235 = vmatprep.subr.bf16.mxu0 0
    %236 = vmatpush2.bf16.msra.mxu0 0
    %237 = vmatprep.subr.bf16.mxu0 0
    %238 = vmatpush2.bf16.msra.mxu0 0
    %239 = vmatprep.subr.bf16.mxu0 0
    %240 = vmatpush2.bf16.msra.mxu0 0
    %241 = vmatprep.subr.bf16.mxu0 0
    %242 = vmatpush2.bf16.msra.mxu0 0
    %243 = vmatprep.subr.bf16.mxu0 0
    %244 = vmatpush2.bf16.msra.mxu0 0
    %245 = vmatprep.mubr.bf16.mxu0 0
    %246 = vmatmul.mubr.bf16.gmra.mxu0 %v160
    %v247 = vpop.f32.mrf.mxu0
    %v248 = vadd.f32 %v164, %v247
    %v249 = vpop.f32.mrf.mxu0
    %v250 = vpop.f32.mrf.mxu0
    %v251 = vadd.f32 %v164, %v250
    %v252 = vpop.f32.mrf.mxu0
    %253 = vdwg.mxu0
    %v254 = vmax.f32 %v248, 0.0
    %v255 = vmax.f32 %v251, 0.0
    %v256 = vpack.c.bf16 %v255, %v254
    %v257 = vlaneseq
    %v258 = vshrl.u32 %v257, 7
    %v259 = vsub.s32 0, %v258
    %v260 = vrot.slane %v96, %v259
    %v277 = vunpack.c.l.b16 %v78
    %v278 = vunpack.c.l.b16 %v79
    %v279 = vunpack.c.l.b16 %v80
    %v280 = vunpack.c.l.b16 %v81
    %v281 = vunpack.c.l.b16 %v82
    %v282 = vunpack.c.l.b16 %v83
    %v283 = vunpack.c.l.b16 %v84
    %v284 = vunpack.c.l.b16 %v85
    %v285 = vunpack.c.l.b16 %v86
    %v286 = vunpack.c.l.b16 %v87
    %v287 = vunpack.c.l.b16 %v88
    %v288 = vunpack.c.l.b16 %v89
    %v289 = vunpack.c.l.b16 %v90
    %v290 = vunpack.c.l.b16 %v91
    %v291 = vunpack.c.l.b16 %v92
    %v292 = vunpack.c.l.b16 %v93
    %v293 = vpack.c.b16 %v278, %v277
    %v294 = vpack.c.b16 %v280, %v279
    %v295 = vpack.c.b16 %v282, %v281
    %v296 = vpack.c.b16 %v284, %v283
    %v297 = vpack.c.b16 %v286, %v285
    %v298 = vpack.c.b16 %v288, %v287
    %v299 = vpack.c.b16 %v290, %v289
    %v300 = vpack.c.b16 %v292, %v291
    %309 = vmatprep.subr.bf16.mxu0 0
    %310 = vmatpush1.bf16.msra.mxu0 %v300
    %311 = vmatprep.subr.bf16.mxu0 0
    %312 = vmatpush1.bf16.msra.mxu0 %v299
    %313 = vmatprep.subr.bf16.mxu0 0
    %314 = vmatpush1.bf16.msra.mxu0 %v298
    %315 = vmatprep.subr.bf16.mxu0 0
    %316 = vmatpush1.bf16.msra.mxu0 %v297
    %317 = vmatprep.subr.bf16.mxu0 0
    %318 = vmatpush1.bf16.msra.mxu0 %v296
    %319 = vmatprep.subr.bf16.mxu0 0
    %320 = vmatpush1.bf16.msra.mxu0 %v295
    %321 = vmatprep.subr.bf16.mxu0 0
    %322 = vmatpush1.bf16.msra.mxu0 %v294
    %323 = vmatprep.subr.bf16.mxu0 0
    %324 = vmatpush1.bf16.msra.mxu0 %v293
    %325 = vmatprep.subr.bf16.mxu0 0
    %326 = vmatpush2.bf16.msra.mxu0 0
    %327 = vmatprep.subr.bf16.mxu0 0
    %328 = vmatpush2.bf16.msra.mxu0 0
    %329 = vmatprep.subr.bf16.mxu0 0
    %330 = vmatpush2.bf16.msra.mxu0 0
    %331 = vmatprep.subr.bf16.mxu0 0
    %332 = vmatpush2.bf16.msra.mxu0 0
    %333 = vmatprep.subr.bf16.mxu0 0
    %334 = vmatpush2.bf16.msra.mxu0 0
    %335 = vmatprep.subr.bf16.mxu0 0
    %336 = vmatpush2.bf16.msra.mxu0 0
    %337 = vmatprep.subr.bf16.mxu0 0
    %338 = vmatpush2.bf16.msra.mxu0 0
    %339 = vmatprep.subr.bf16.mxu0 0
    %340 = vmatpush2.bf16.msra.mxu0 0
    %341 = vmatprep.mubr.bf16.mxu0 0
    %342 = vmatmul.mubr.bf16.gmra.mxu0 %v256
    %v343 = vpop.f32.mrf.mxu0
    %v344 = vadd.f32 %v260, %v343
    %v345 = vpop.f32.mrf.mxu0
    %v346 = vpop.f32.mrf.mxu0
    %v347 = vadd.f32 %v260, %v346
    %v348 = vpop.f32.mrf.mxu0
    %349 = vdwg.mxu0
    %350 = vmax.xlane.f32.xlu0 %v344
    %v351 = vpop.xlane.xlu0 %350
    %352 = vmax.xlane.f32.xlu0 %v347
    %v353 = vpop.xlane.xlu0 %352
    %v354 = vsub.f32 %v344, %v351
    %v355 = vsub.f32 %v347, %v353
    %v356 = vmul.f32 %v354, 1.442695
    %v357 = vpow.pop %v356
    %v358 = vmul.f32 %v355, 1.442695
    %v359 = vpow.pop %v358
    %360 = vadd.xlane.f32.xlu0 %v357
    %v361 = vpop.xlane.xlu0 %360
    %362 = vadd.xlane.f32.xlu0 %v359
    %v363 = vpop.xlane.xlu0 %362
    %v364 = vlog2.pop %v361
    %v365 = vmul.f32 %v364, 0.6931472
    %v366 = vlog2.pop %v363
    %v367 = vmul.f32 %v366, 0.6931472
    %v368 = vadd.f32 %v365, %v351
    %v369 = vadd.f32 %v367, %v353
    %v370 = vsub.f32 %v344, %v368
    %v371 = vsub.f32 %v347, %v369
    %v372 = vpack.c.bf16 %v371, %v370
    %v374 = vunpack.c.l.b16 %v372
    %v375 = vunpack.c.h.b16 %v372
    %v376 = vpack.c.b16 %v374, %v374
    %v377 = vpack.c.b16 %v375, %v375
    %380 = vst [vmem:[#allocation8] sm:$0xf] %v376
    %381 = vst [vmem:[#allocation8 + $0x4] sm:$0xf] %v377
    // Predicated region
    $region26: #{tpu_custom_call.1} parent=1 // pred_check
      _
    $region27: #{tpu_custom_call.1} parent=1 // pred_check_branch
      %383 = sbr.rel (0) target = $region29
    $region28: #{tpu_custom_call.1} parent=1 // pred_region
      %s385 = ssub.s32 128, 128
      %386 = vsyncadd [#allocation4], %s385
      %s387 = sshll.u32 [#allocation8], 4
      %s388 = int_to_ptr.vmem [resolvable:$true] %s387
      %393 = dma.vmem_to_hbm [thread:$0]  %s388, 128, %s3, [#allocation4], 64, 64, 4
    $region29: #{tpu_custom_call.1} parent=1 // pred_fallthru
      _
    // Predicated region
    $region30: #{tpu_custom_call.1} parent=1 // pred_check
      _
    $region31: #{tpu_custom_call.1} parent=1 // pred_check_branch
      %395 = sbr.rel (0) target = $region33
    $region32: #{tpu_custom_call.1} parent=1 // pred_region
      %396 = dma.done [#allocation4], 128
    $region33: #{tpu_custom_call.1} parent=1 // pred_fallthru
      _
    %397 = vsyncpa [#allocation3], 1
    %398 = vsyncpa [#allocation6], 1
    %399 = vsyncpa [#allocation4], 1

</llo_original>
